<compile_context>
chip_gen: v7x
topology: tpu7x:2x2x1
jax: 0.10.0
libtpu: 0.0.40
codegen_flags: <defaults>
</compile_context>

<pallas_src>
import functools

import jax
import jax.numpy as jnp
from jax.experimental import pallas as pl
from jax.experimental.pallas import tpu as pltpu


# ----------------------------------------------------------------------------
# Lane-roll helper (np.roll semantics: result[..., p] = x[..., (p - shift) % n])
# ----------------------------------------------------------------------------
_ROLL_SIGN_CACHE = {}


def _roll_sign():
    """Probe pltpu.roll's rotation convention, normalized to np.roll.

    Keyed on the active default backend so the cached sign always matches the
    backend that will execute the kernels."""
    backend = jax.default_backend()
    if backend not in _ROLL_SIGN_CACHE:
        def k(x_ref, o_ref):
            o_ref[...] = pltpu.roll(x_ref[...], 1, axis=1)

        x = jnp.arange(128, dtype=jnp.float32).reshape(1, 128)
        y = pl.pallas_call(k, out_shape=jax.ShapeDtypeStruct((1, 128), jnp.float32))(x)
        _ROLL_SIGN_CACHE[backend] = 1 if float(y[0, 0]) == 127.0 else -1
    return _ROLL_SIGN_CACHE[backend]


def _lane_roll(x, shift, sign):
    """np.roll(x, shift, axis=-1), lowered to the XLU rotate slot."""
    n = x.shape[-1]
    s = (sign * shift) % n
    if s == 0:
        return x
    return pltpu.roll(x, s, axis=x.ndim - 1)


# ----------------------------------------------------------------------------
# Fused Network kernel: RBF trunk + DIAC + residual, all VMEM resident.
#   Layout: [channels, L] with L = bp*Hs*Ws packed on the lane axis.
# ----------------------------------------------------------------------------
def _network_kernel(*refs, ksizes, res_num, n_iter, c, diac_ks, Hs, Ws, roll_sign):
    n_layers = len(ksizes)
    s_ref = refs[0]                                   # [c, L] f32 (downsampled S)
    x_ref = refs[1]                                   # [ks_in, L] f32 (Filter)
    w_refs = refs[2:2 + n_layers]                     # each [Cout, K*K*Cin] bf16
    b_refs = refs[2 + n_layers:2 + 2 * n_layers]      # each [Cout, 1] f32
    o_ref = refs[2 + 2 * n_layers]                    # [c, L] f32 (SB)
    stk_ref = refs[2 + 2 * n_layers + 1]              # [K*K*Cin_max, L] bf16 scratch

    L = x_ref.shape[-1]
    M = Hs * Ws
    pix = jax.lax.broadcasted_iota(jnp.int32, (1, L), 1) % M   # per-image pixel id
    w_idx = pix % Ws
    h_idx = pix // Ws

    # Hoisted multiplicative zero-padding masks, one per (offset, Cin), shared
    # across all conv layers (JAX does not CSE broadcast_in_dim -> build once).
    mask_cache = {}

    def tap_mask(dy, dx, cin):
        key = (dy, dx, cin)
        if key not in mask_cache:
            valid = ((h_idx + dy >= 0) & (h_idx + dy < Hs)
                     & (w_idx + dx >= 0) & (w_idx + dx < Ws))
            mask_cache[key] = jnp.broadcast_to(valid.astype(jnp.float32), (cin, L))
        return mask_cache[key]

    def conv(x, w_ref, b_ref, ksize, relu):
        # x: [Cin, L] f32.  All K*K shifted+masked copies are written into one
        # bf16 VMEM slab -> a single deep-contraction MXU dot per layer.
        cin = x.shape[0]
        pad = ksize // 2
        tap = 0
        for dy in range(-pad, pad + 1):
            for dx in range(-pad, pad + 1):
                if dy == 0 and dx == 0:
                    xs = x
                else:
                    xs = _lane_roll(x, -(dy * Ws + dx), roll_sign) * tap_mask(dy, dx, cin)
                stk_ref[pl.ds(tap * cin, cin), :] = xs.astype(jnp.bfloat16)
                tap += 1
        kk = ksize * ksize * cin
        acc = jnp.dot(w_ref[...], stk_ref[pl.ds(0, kk), :],
                      preferred_element_type=jnp.float32)      # [Cout, L]
        acc = acc + b_ref[...]
        return jnp.maximum(acc, 0.0) if relu else acc

    # ---- RBF trunk: conv0 -> 2*res_num residual units -> convL --------------
    x = conv(x_ref[...], w_refs[0], b_refs[0], ksizes[0], True)
    li = 1
    for _ in range(2 * res_num):
        h = conv(x, w_refs[li], b_refs[li], ksizes[li], True)
        li += 1
        x = x + conv(h, w_refs[li], b_refs[li], ksizes[li], False)
        li += 1
    rbf = conv(x, w_refs[li], b_refs[li], ksizes[li], False)    # [crbf, L] f32

    # ---- DIAC (fused): iterative separable per-pixel filtering + residual ---
    m_w0 = jnp.broadcast_to(w_idx > 0, (c, L))
    m_w1 = jnp.broadcast_to(w_idx < Ws - 1, (c, L))
    m_h0 = jnp.broadcast_to(h_idx > 0, (c, L))
    m_h1 = jnp.broadcast_to(h_idx < Hs - 1, (c, L))

    def w_minus(v):   # value at (h, w-1), replicate-clamped
        return jnp.where(m_w0, _lane_roll(v, 1, roll_sign), v)

    def w_plus(v):    # value at (h, w+1), replicate-clamped
        return jnp.where(m_w1, _lane_roll(v, -1, roll_sign), v)

    def h_minus(v):   # value at (h-1, w), replicate-clamped
        return jnp.where(m_h0, _lane_roll(v, Ws, roll_sign), v)

    def h_plus(v):    # value at (h+1, w), replicate-clamped
        return jnp.where(m_h1, _lane_roll(v, -Ws, roll_sign), v)

    pad = (diac_ks - 1) // 2
    nf = n_iter * 2 * diac_ks * c
    s0 = s_ref[...]                                             # [c, L] f32
    feat = s0
    for i in range(n_iter):
        for d, (neg, pos) in enumerate(((w_minus, w_plus), (h_minus, h_plus))):
            shifted = [None] * diac_ks
            shifted[pad] = feat
            cur = feat
            for j in range(1, pad + 1):
                cur = neg(cur)
                shifted[pad - j] = cur
            cur = feat
            for j in range(1, pad + 1):
                cur = pos(cur)
                shifted[pad + j] = cur
            acc = None
            for t in range(diac_ks):
                r0 = ((i * 2 + d) * diac_ks + t) * c
                term = rbf[r0:r0 + c, :] * shifted[t]
                acc = term if acc is None else acc + term
            feat = acc
        feat = feat + rbf[nf + i * c: nf + (i + 1) * c, :]       # per-iteration bias
        if i < n_iter - 1:                                       # is_act_last=False
            feat = jnp.where(feat > 0, feat, 0.1 * feat)         # LeakyReLU(0.1)

    o_ref[...] = feat + s0                                       # SB = DIAC(S) + S


# ----------------------------------------------------------------------------
# Host-side layout plumbing
# ----------------------------------------------------------------------------
def _choose_batch_pack(B, M, target=128):
    """Smallest divisor bp of B with bp*M >= target lanes (lane-dense blocks)."""
    for bp in range(1, B + 1):
        if B % bp == 0 and bp * M >= target:
            return bp
    return B


def _diac_perm(n_iter, c, ks):
    # New row r = ((i*2 + d)*ks + t)*c + ch  <-  original channel
    #             i*(2*c*ks) + d*(c*ks) + ch*ks + t ; biases keep their order.
    perm = []
    for i in range(n_iter):
        for d in range(2):
            for t in range(ks):
                for ch in range(c):
                    perm.append(i * (2 * c * ks) + d * (c * ks) + ch * ks + t)
    base = n_iter * 2 * c * ks
    for i in range(n_iter):
        for ch in range(c):
            perm.append(base + i * c + ch)
    return jnp.array(perm, dtype=jnp.int32)


def _prep_weight(w_oihw):
    # OIHW -> [Cout, K*K*Cin] bf16 with flat index (ky*K + kx)*Cin + ci, so one
    # MXU dot against the stacked-tap slab implements the whole KxK conv.
    cout, cin, kh, kw = w_oihw.shape
    w = jnp.transpose(w_oihw, (0, 2, 3, 1)).reshape(cout, kh * kw * cin)
    return w.astype(jnp.bfloat16)


def network_forward(S, Filter, params, *, cfg):
    B, _, H, W = S.shape
    assert H % 8 == 0 and W % 8 == 0, "nearest 1/8 downsample needs H, W % 8 == 0"
    Hs, Ws = H // 8, W // 8
    M = Hs * Ws
    c = 3
    n_iter, rbfs, res_num = cfg["RBF_num"], cfg["RBFs"], cfg["res_num"]
    crbf = n_iter * (3 * rbfs * 2) + n_iter * 3

    # F.interpolate(scale_factor=1/8, mode='nearest') == stride-8 subsample.
    S_ds = S[:, :, ::8, ::8].astype(jnp.float32)

    # Pack bp batch images into the lane axis so the last dim is >= 128
    # (lane-dense loads/stores/MXU passes); the per-image boundary masks inside
    # the kernel keep the rolls from mixing images.
    bp = _choose_batch_pack(B, M)
    G = B // bp
    L = bp * M

    def pack(x):  # [B, C, Hs, Ws] -> [G, C, bp*M]
        Cx = x.shape[1]
        return x.reshape(G, bp, Cx, M).transpose(0, 2, 1, 3).reshape(G, Cx, L)

    s_packed = pack(S_ds)
    filt_packed = pack(Filter.astype(jnp.float32))

    # Conv layers in execution order; convL's output channels are pre-permuted
    # (weight-side layout plumbing) so the trunk emits rbf directly in DIAC's
    # tap-major layout.
    perm = _diac_perm(n_iter, c, rbfs)
    layer_wb = [params["conv0"]]
    for blk in range(2):
        for r in range(res_num):
            w1, b1, w2, b2 = params[f"rb{blk}_{r}"]
            layer_wb.append((w1, b1))
            layer_wb.append((w2, b2))
    wl, bl = params["convL"]
    layer_wb.append((wl[perm], bl[perm]))

    weights = [_prep_weight(w) for (w, _) in layer_wb]
    biases = [b.reshape(-1, 1).astype(jnp.float32) for (_, b) in layer_wb]
    ksizes = [cfg["ks"]] * (1 + 4 * res_num) + [3]
    kk_max = max(w.shape[1] for w in weights)
    assert weights[-1].shape[0] == crbf

    in_specs = [pl.BlockSpec((None, c, L), lambda g: (g, 0, 0)),
                pl.BlockSpec((None, filt_packed.shape[1], L), lambda g: (g, 0, 0))]
    for w in weights:
        in_specs.append(pl.BlockSpec(w.shape, lambda g: (0, 0)))
    for b in biases:
        in_specs.append(pl.BlockSpec(b.shape, lambda g: (0, 0)))

    kernel = functools.partial(
        _network_kernel, ksizes=tuple(ksizes), res_num=res_num, n_iter=n_iter,
        c=c, diac_ks=rbfs, Hs=Hs, Ws=Ws, roll_sign=_roll_sign())

    # TODO(synk): for very large images, tile L with a 1-pixel halo and add a
    # second "parallel" grid axis (keeps both v7x TensorCores busy at G == 1)
    # and set vmem_limit_bytes explicitly.
    sb_packed = pl.pallas_call(
        kernel,
        out_shape=jax.ShapeDtypeStruct((G, c, L), jnp.float32),
        grid=(G,),
        in_specs=in_specs,
        out_specs=pl.BlockSpec((None, c, L), lambda g: (g, 0, 0)),
        scratch_shapes=[pltpu.VMEM((kk_max, L), jnp.bfloat16)],
        compiler_params=pltpu.CompilerParams(dimension_semantics=("parallel",)),
    )(s_packed, filt_packed, *weights, *biases)

    sb = (sb_packed.reshape(G, c, bp, M).transpose(0, 2, 1, 3)
          .reshape(B, c, Hs, Ws))
    return {"SB": sb}


# ----------------------------------------------------------------------------
# Parameters
# ----------------------------------------------------------------------------
def xavier_uniform(key, shape, gain):
    cout, cin, kh, kw = shape
    fan_in, fan_out = cin * kh * kw, cout * kh * kw
    bound = gain * (6.0 / (fan_in + fan_out)) ** 0.5
    return jax.random.uniform(key, shape, jnp.float32, -bound, bound)


def init_params(key, cfg, ks_in):
    ch4 = cfg["ch"] * 4
    cout_rbf = cfg["RBF_num"] * (3 * cfg["RBFs"] * 2) + cfg["RBF_num"] * 3
    ks = cfg["ks"]
    keys = iter(jax.random.split(key, 2 + 4 * cfg["res_num"]))
    params = {
        "conv0": (xavier_uniform(next(keys), (ch4, ks_in, ks, ks), cfg["wiRF"]),
                  jnp.zeros((ch4,), jnp.float32)),
    }
    for blk in range(2):
        for r in range(cfg["res_num"]):
            w1 = xavier_uniform(next(keys), (ch4, ch4, ks, ks), cfg["wiRF"])
            w2 = xavier_uniform(next(keys), (ch4, ch4, ks, ks), cfg["wiRF"])
            params[f"rb{blk}_{r}"] = (w1, jnp.zeros((ch4,), jnp.float32),
                                      w2, jnp.zeros((ch4,), jnp.float32))
    params["convL"] = (xavier_uniform(next(keys), (cout_rbf, ch4, 3, 3), cfg["wiRF"]),
                       jnp.zeros((cout_rbf,), jnp.float32))
    return params


# ----------------------------------------------------------------------------
# Pure-JAX reference (same bf16-matmul / f32-accumulate precision) for checking.
# ----------------------------------------------------------------------------
def _ref_conv(x, w, b, relu):
    y = jax.lax.conv_general_dilated(
        x.astype(jnp.bfloat16), w.astype(jnp.bfloat16),
        window_strides=(1, 1), padding="SAME",
        dimension_numbers=("NCHW", "OIHW", "NCHW"),
        preferred_element_type=jnp.float32)
    y = y + b.reshape(1, -1, 1, 1)
    return jnp.maximum(y, 0.0) if relu else y


def _ref_diac(S_ds, rbf, n_iter, c, ks):
    B, _, Hs, Ws = S_ds.shape
    pad = (ks - 1) // 2
    bias_base = n_iter * 2 * c * ks
    feat = S_ds
    for i in range(n_iter):
        base = i * 2 * c * ks
        for d in range(2):
            dbase = base + d * c * ks
            if d == 0:
                xp = jnp.pad(feat, ((0, 0), (0, 0), (0, 0), (pad, pad)), mode="edge")
            else:
                xp = jnp.pad(feat, ((0, 0), (0, 0), (pad, pad), (0, 0)), mode="edge")
            chans = []
            for ch in range(c):
                s = jnp.zeros((B, Hs, Ws), jnp.float32)
                for t in range(ks):
                    k = rbf[:, dbase + ch * ks + t]
                    if d == 0:
                        s = s + k * xp[:, ch, :, t:t + Ws]
                    else:
                        s = s + k * xp[:, ch, t:t + Hs, :]
                chans.append(s)
            feat = jnp.stack(chans, axis=1)
        feat = feat + rbf[:, bias_base + i * c: bias_base + (i + 1) * c]
        if i < n_iter - 1:
            feat = jnp.where(feat > 0, feat, 0.1 * feat)
    return feat


def network_ref(S, Filter, params, *, cfg):
    S_ds = S[:, :, ::8, ::8].astype(jnp.float32)
    x = Filter.astype(jnp.float32)
    w, b = params["conv0"]
    x = _ref_conv(x, w, b, True)
    for blk in range(2):
        for r in range(cfg["res_num"]):
            w1, b1, w2, b2 = params[f"rb{blk}_{r}"]
            h = _ref_conv(x, w1, b1, True)
            x = x + _ref_conv(h, w2, b2, False)
    w, b = params["convL"]
    rbf = _ref_conv(x, w, b, False)
    return _ref_diac(S_ds, rbf, cfg["RBF_num"], 3, cfg["RBFs"]) + S_ds


if __name__ == "__main__":
    cfg = dict(ks=3, RBFs=3, RBF_num=2, res_num=1, wiRF=1.0, ch=8)
    ks_in = 16
    B, H, W = 2, 64, 64

    key = jax.random.PRNGKey(0)
    kp, ks_key, kf_key = jax.random.split(key, 3)
    S = jax.random.normal(ks_key, (B, 3, H, W), jnp.float32)
    Filter = jax.random.normal(kf_key, (B, ks_in, H // 8, W // 8), jnp.float32)
    params = init_params(kp, cfg, ks_in)

    _roll_sign()  # resolve the roll convention once, eagerly, before jit tracing

    fwd = jax.jit(functools.partial(network_forward, cfg=cfg))
    SB = fwd(S, Filter, params)["SB"]
    jax.block_until_ready(SB)
    assert SB.shape == (B, 3, H // 8, W // 8), SB.shape
    assert SB.dtype == jnp.float32

    # Validate against the pure-JAX reference (same bf16/f32 matmul precision).
    SB_ref = jax.jit(functools.partial(network_ref, cfg=cfg))(S, Filter, params)
    jax.block_until_ready(SB_ref)
    err = float(jnp.max(jnp.abs(SB - SB_ref)))
    scale = float(jnp.max(jnp.abs(SB_ref))) + 1.0
    assert err / scale < 5e-3, (err, scale)

    print("KERNEL_OK")
</pallas_src>

<mosaic_0001>
module attributes {stable_mosaic.version = 11 : i64} {
  func.func @k(%arg0: memref<1x128xf32, #tpu.memory_space<vmem>>, %arg1: memref<1x128xf32, #tpu.memory_space<vmem>>) attributes {dimension_semantics = [], scalar_prefetch = 0 : i64, scratch_operands = 0 : i64, tpu.core_type = #tpu.core_type<tc>} {
    %c0 = arith.constant 0 : index
    %c0_0 = arith.constant 0 : index
    %0 = vector.load %arg0[%c0, %c0_0] : memref<1x128xf32, #tpu.memory_space<vmem>>, vector<1x128xf32>
    %c1_i32 = arith.constant 1 : i32
    %1 = tpu.dynamic_rotate %0 by %c1_i32 dim 1 : vector<1x128xf32>, i32 -> vector<1x128xf32>
    %c0_1 = arith.constant 0 : index
    %c0_2 = arith.constant 0 : index
    %2 = vector.load %arg1[%c0_1, %c0_2] : memref<1x128xf32, #tpu.memory_space<vmem>>, vector<1x128xf32>
    tpu.vector_store %arg1[%c0_1, %c0_2], %1 {strides = array<i32>} : memref<1x128xf32, #tpu.memory_space<vmem>>, vector<1x128xf32>,
    return
  }
}

</mosaic_0001>

<llo_original>
// kernel: tpu_custom_call.1
$region0: #{tpu_custom_call.1}
  #allocation0 [shape = 'u32[]', space=smem, size = 0x4, offset = 0x4, fixed_abs, tag = 'smem constant byte address 0x4 - core index']
  #allocation1 [shape = 'u32[144,128]{1,0:T(1,128)}', space=vmem, size = 0x12000, scoped, tag = 'internal scratch']
  %s0 = inlined_call_operand.hbm [shape: f32[1,128], index: 0, kind: input, shape index: {}]
  %s1 = inlined_call_operand.hbm [shape: f32[1,128], index: 1, kind: output, shape index: {}]
  %s2 = sld [smem:[#allocation0]]
  $region18: #{tpu_custom_call.1} parent=0
    _
  %s4 = ssub.s32 1, %s2
  %s5 = scalar_select 0, %s4, %s2
  $region1: #{tpu_custom_call.1} parent=0
    #allocation2 [shape = 'u8[512]{0}', space=vmem, size = 0x400, scoped, tag = 'input window, operand 0, single buffered']
    #allocation3 [shape = 's32[1]{0}', space=sflag, size = 0x4, scoped, tag = 'scoped memory for tpu_custom_call.1']
    #allocation4 [shape = 's32[1]{0}', space=sflag, size = 0x4, scoped, tag = 'scoped memory for tpu_custom_call.1']
    #allocation5 [shape = 'u8[512]{0}', space=vmem, size = 0x400, scoped, tag = 'output window, operand 0, single buffered']
    %6 = vsyncpa [#allocation3], 0
    %7 = vsyncpa [#allocation4], 0
    // Predicated region
    $region2: #{tpu_custom_call.1} parent=1 // pred_check
      _
    $region3: #{tpu_custom_call.1} parent=1 // pred_check_branch
      %9 = sbr.rel (0) target = $region5
    $region4: #{tpu_custom_call.1} parent=1 // pred_region
      %s11 = ssub.s32 16, 16
      %12 = vsyncadd [#allocation3], %s11
      %s14 = sshll.u32 [#allocation2], 4
      %s15 = int_to_ptr.vmem [resolvable:$true] %s14
      %17 = dma.hbm_to_vmem [thread:$0]  %s0, 16, %s15, [#allocation3]
    $region5: #{tpu_custom_call.1} parent=1 // pred_fallthru
      _
    // Predicated region
    $region6: #{tpu_custom_call.1} parent=1 // pred_check
      _
    $region7: #{tpu_custom_call.1} parent=1 // pred_check_branch
      %19 = sbr.rel (0) target = $region9
    $region8: #{tpu_custom_call.1} parent=1 // pred_region
      %20 = dma.done [#allocation3], 16
    $region9: #{tpu_custom_call.1} parent=1 // pred_fallthru
      _
    %v21 = vld [vmem:[#allocation2] sm:$0x1]
    %22 = vrot.lane.b32.xlu0 %v21, 1
    %v23 = vpop.permute.xlu0 %22
    %24 = vst [vmem:[#allocation5] sm:$0x1] %v23
    // Predicated region
    $region10: #{tpu_custom_call.1} parent=1 // pred_check
      _
    $region11: #{tpu_custom_call.1} parent=1 // pred_check_branch
      %26 = sbr.rel (0) target = $region13
    $region12: #{tpu_custom_call.1} parent=1 // pred_region
      %s28 = ssub.s32 16, 16
      %29 = vsyncadd [#allocation4], %s28
      %s31 = sshll.u32 [#allocation5], 4
      %s32 = int_to_ptr.vmem [resolvable:$true] %s31
      %34 = dma.vmem_to_hbm [thread:$0]  %s32, 16, %s1, [#allocation4]
    $region13: #{tpu_custom_call.1} parent=1 // pred_fallthru
      _
    // Predicated region
    $region14: #{tpu_custom_call.1} parent=1 // pred_check
      _
    $region15: #{tpu_custom_call.1} parent=1 // pred_check_branch
      %36 = sbr.rel (0) target = $region17
    $region16: #{tpu_custom_call.1} parent=1 // pred_region
      %37 = dma.done [#allocation4], 16
    $region17: #{tpu_custom_call.1} parent=1 // pred_fallthru
      _
    %38 = vsyncpa [#allocation3], 1
    %39 = vsyncpa [#allocation4], 1

</llo_original>
